<compile_context>
chip_gen: v5e
topology: v5e:2x2
jax: 0.10.0
libtpu: 0.0.40
codegen_flags: <defaults>
</compile_context>

<pallas_src>
import jax
import jax.numpy as jnp
from jax.experimental import pallas as pl
from jax.experimental.pallas import tpu as pltpu


_LANE = 128                         # TPU vreg lane width
_MAX_BLOCK_ELEMS = 2 * 1024 * 1024  # ~2M elems/block: 2 MB u8 in + 8 MB f32 out
_MULTI_STEP_ELEMS = 256 * 1024      # above this, force >= 2 grid steps (v7x megacore)


def _make_to_tensor_kernel(scale: float):
    def kernel(x_ref, o_ref):
        # x_ref: (tR, cols) block of the flat CHW image (input dtype, e.g. uint8)
        # o_ref: (tR, cols) float32 output block
        o_ref[...] = x_ref[...].astype(jnp.float32) * jnp.float32(scale)
    return kernel


def _lane_dense_view(n: int):
    """Pick (padded_n, cols) so the flat buffer has a lane-dense minor dim."""
    for cols in (1024, 512, 256, _LANE):
        if n % cols == 0:
            return n, cols
    # Pad to a multiple of 1024 (8 sublanes x 128 lanes) -> unmasked f32 stores.
    cols = 1024 if n >= 1024 else _LANE
    n_pad = -(-n // cols) * cols
    return n_pad, cols


def _pick_row_tile(rows: int, cols: int) -> int:
    """Row tile: big blocks, but >= 2 (even) grid steps for larger inputs."""
    n = rows * cols
    if n <= _MULTI_STEP_ELEMS:
        return rows                              # single full-array block (always legal)
    steps = max(2, -(-n // _MAX_BLOCK_ELEMS))
    if steps % 2:
        steps += 1                               # even split: both v7x TCs get equal work
    t = -(-rows // steps)
    if t >= 32:
        t -= t % 32                              # align to u8 (32,128) / f32 (8,128) tiles
    return max(t, 1)


def to_tensor(image_hwc, output_ndim: int = 4):
    """Pallas equivalent of To_tensor.forward for array (HWC) inputs."""
    H, W, C = image_hwc.shape
    # to_tensor only rescales uint8 images; float inputs pass through unscaled.
    # TODO(synk): torchvision keeps non-uint8 integer / float64 inputs in their
    # original dtype; here the output is always float32.
    scale = 1.0 / 255.0 if image_hwc.dtype == jnp.uint8 else 1.0

    # Layout plumbing (all on the 1-byte input side): HWC -> CHW, flatten, pad
    # to a lane-dense 2-D slab.
    n = C * H * W
    x_flat = jnp.transpose(image_hwc, (2, 0, 1)).reshape(-1)
    n_pad, cols = _lane_dense_view(n)
    if n_pad != n:
        x_flat = jnp.pad(x_flat, (0, n_pad - n))
    rows = n_pad // cols
    x2d = x_flat.reshape(rows, cols)

    tR = _pick_row_tile(rows, cols)

    in_itemsize = jnp.dtype(image_hwc.dtype).itemsize
    block_bytes = tR * cols * (in_itemsize + 4)
    # Double-buffered blocks + margin; explicit so big blocks fit v5e's 16 MiB
    # default scoped VMEM and stay under v7x's 64 MiB physical VMEM.
    vmem_limit = int(min(64 << 20, max(16 << 20, 2 * block_bytes + (8 << 20))))

    out2d = pl.pallas_call(
        _make_to_tensor_kernel(scale),
        out_shape=jax.ShapeDtypeStruct((rows, cols), jnp.float32),
        grid=(pl.cdiv(rows, tR),),
        in_specs=[pl.BlockSpec((tR, cols), lambda i: (i, 0))],
        out_specs=pl.BlockSpec((tR, cols), lambda i: (i, 0)),
        compiler_params=pltpu.CompilerParams(
            dimension_semantics=("parallel",),
            allow_input_fusion=[True],
            vmem_limit_bytes=vmem_limit,
        ),
        cost_estimate=pl.CostEstimate(
            flops=n_pad,
            transcendentals=0,
            bytes_accessed=n_pad * in_itemsize + n_pad * 4,
        ),
    )(x2d)

    out_chw = out2d.reshape(-1)[:n].reshape(C, H, W)
    if output_ndim == 4:
        return out_chw[None, ...]
    return out_chw


if __name__ == "__main__":
    key = jax.random.PRNGKey(0)
    k_u8, k_f32, k_big = jax.random.split(key, 3)

    # Case 1: uint8 input, exactly lane-dense path (768 % 256 == 0), NCHW out.
    H, W, C = 16, 16, 3
    img_u8 = jax.random.randint(k_u8, (H, W, C), 0, 256, dtype=jnp.int32).astype(
        jnp.uint8
    )
    out = jax.block_until_ready(to_tensor(img_u8, output_ndim=4))
    ref = (jnp.transpose(img_u8, (2, 0, 1)).astype(jnp.float32) / 255.0)[None, ...]
    assert out.shape == (1, C, H, W), out.shape
    assert out.dtype == jnp.float32, out.dtype
    assert jnp.allclose(out, ref, atol=1e-6), "mismatch vs reference (uint8 path)"

    # Case 2: float input (no scaling), padded lane-dense path, CHW (3-D) output.
    H2, W2, C2 = 16, 5, 3
    img_f32 = jax.random.uniform(k_f32, (H2, W2, C2), dtype=jnp.float32)
    out2 = jax.block_until_ready(to_tensor(img_f32, output_ndim=3))
    ref2 = jnp.transpose(img_f32, (2, 0, 1)).astype(jnp.float32)
    assert out2.shape == (C2, H2, W2), out2.shape
    assert out2.dtype == jnp.float32, out2.dtype
    assert jnp.allclose(out2, ref2, atol=1e-6), "mismatch vs reference (float path)"

    # Case 3: modest real-image size exercising the multi-step tiled path
    # (277,248 elems > 256K threshold -> >= 2 grid steps, 32-aligned row tiles).
    H3, W3, C3 = 304, 304, 3
    img_big = jax.random.randint(k_big, (H3, W3, C3), 0, 256, dtype=jnp.int32).astype(
        jnp.uint8
    )
    out3 = jax.block_until_ready(to_tensor(img_big, output_ndim=4))
    ref3 = (jnp.transpose(img_big, (2, 0, 1)).astype(jnp.float32) / 255.0)[None, ...]
    assert out3.shape == (1, C3, H3, W3), out3.shape
    assert jnp.allclose(out3, ref3, atol=1e-6), "mismatch vs reference (tiled path)"

    # TODO(synk): PIL.Image inputs (mode-dependent decoding) have no Pallas
    # equivalent; only array inputs are supported here.
    print("KERNEL_OK")
</pallas_src>

<mosaic_0001>
module attributes {stable_mosaic.version = 11 : i64} {
  func.func @kernel(%arg0: i32, %arg1: memref<3x256xi8, #tpu.memory_space<vmem>>, %arg2: memref<3x256xf32, #tpu.memory_space<vmem>>) attributes {dimension_semantics = [#tpu.dimension_semantics<parallel>], iteration_bounds = array<i64: 1>, scalar_prefetch = 0 : i64, scratch_operands = 0 : i64, tpu.core_type = #tpu.core_type<tc>, window_params = [{transform_indices = @transform_0, window_bounds = array<i64: 3, 256>}, {transform_indices = @transform_1, window_bounds = array<i64: 3, 256>}]} {
    %c0 = arith.constant 0 : index
    %c0_0 = arith.constant 0 : index
    %0 = vector.load %arg1[%c0, %c0_0] : memref<3x256xi8, #tpu.memory_space<vmem>>, vector<3x256xi8>
    %1 = arith.uitofp %0 : vector<3x256xi8> to vector<3x256xf32>
    %cst = arith.constant 0.00392156886 : f32
    %2 = vector.broadcast %cst : f32 to vector<3x256xf32>
    %3 = arith.mulf %1, %2 : vector<3x256xf32>
    %c0_1 = arith.constant 0 : index
    %c0_2 = arith.constant 0 : index
    %4 = vector.load %arg2[%c0_1, %c0_2] : memref<3x256xf32, #tpu.memory_space<vmem>>, vector<3x256xf32>
    tpu.vector_store %arg2[%c0_1, %c0_2], %3 {strides = array<i32>} : memref<3x256xf32, #tpu.memory_space<vmem>>, vector<3x256xf32>,
    return
  }
  func.func @transform_0(%arg0: i32) -> (i32, i32) {
    %c0_i32 = arith.constant 0 : i32
    %c0_i32_0 = arith.constant 0 : i32
    return %arg0, %c0_i32 : i32, i32
  }
  func.func @transform_1(%arg0: i32) -> (i32, i32) {
    %c0_i32 = arith.constant 0 : i32
    %c0_i32_0 = arith.constant 0 : i32
    return %arg0, %c0_i32 : i32, i32
  }
}

</mosaic_0001>

<llo_original>
// kernel: tpu_custom_call.1
$region0: #{tpu_custom_call.1}
  #allocation0 [shape = 'u32[]', space=smem, size = 0x4, offset = 0x4, fixed_abs, tag = 'smem constant byte address 0x4 - core index']
  #allocation1 [shape = 'u32[72,128]{1,0:T(1,128)}', space=vmem, size = 0x9000, scoped, tag = 'internal scratch']
  %s0 = inlined_call_operand.hbm [shape: u8[3,256], index: 0, kind: input, shape index: {}]
  %s1 = inlined_call_operand.hbm [shape: f32[3,256], index: 1, kind: output, shape index: {}]
  %s2 = sld [smem:[#allocation0]]
  $region18: #{tpu_custom_call.1} parent=0
    _
  %s4 = ssub.s32 1, %s2
  %s5 = scalar_select 0, %s4, %s2
  $region1: #{tpu_custom_call.1} parent=0
    #allocation2 [shape = 'u8[1024]{0}', space=vmem, size = 0x400, scoped, tag = 'input window, operand 0, single buffered']
    #allocation3 [shape = 's32[1]{0}', space=sflag, size = 0x4, scoped, tag = 'scoped memory for tpu_custom_call.1']
    #allocation4 [shape = 's32[1]{0}', space=sflag, size = 0x4, scoped, tag = 'scoped memory for tpu_custom_call.1']
    #allocation5 [shape = 'u8[4096]{0}', space=vmem, size = 0x1000, scoped, tag = 'output window, operand 0, single buffered']
    %6 = vsyncpa [#allocation3], 0
    %7 = vsyncpa [#allocation4], 0
    // Predicated region
    $region2: #{tpu_custom_call.1} parent=1 // pred_check
      _
    $region3: #{tpu_custom_call.1} parent=1 // pred_check_branch
      %9 = sbr.rel (0) target = $region5
    $region4: #{tpu_custom_call.1} parent=1 // pred_region
      %11 = vsyncadd [#allocation3], 0
      %s13 = sshll.u32 %s0, 4
      %s14 = int_to_ptr.hbm [resolvable:$true] %s13
      %s15 = sshll.u32 [#allocation2], 4
      %s16 = int_to_ptr.vmem [resolvable:$true] %s15
      %18 = dma.hbm_to_vmem [thread:$0]  %s14, 32, %s16, [#allocation3]
    $region5: #{tpu_custom_call.1} parent=1 // pred_fallthru
      _
    // Predicated region
    $region6: #{tpu_custom_call.1} parent=1 // pred_check
      _
    $region7: #{tpu_custom_call.1} parent=1 // pred_check_branch
      %20 = sbr.rel (0) target = $region9
    $region8: #{tpu_custom_call.1} parent=1 // pred_region
      %22 = dma.done [#allocation3], 32
    $region9: #{tpu_custom_call.1} parent=1 // pred_fallthru
      _
    %v23 = vld [vmem:[#allocation2] sm:$0x3]
    %v24 = vunpack.c.0.s8 %v23
    %v25 = vand.u32 %v24, 255
    %v26 = vcvt.s32.f32 %v25
    %v27 = vmul.f32 %v26, 0.003921569
    %28 = vst [vmem:[#allocation5] sm:$0x77] %v27
    // Predicated region
    $region10: #{tpu_custom_call.1} parent=1 // pred_check
      _
    $region11: #{tpu_custom_call.1} parent=1 // pred_check_branch
      %30 = sbr.rel (0) target = $region13
    $region12: #{tpu_custom_call.1} parent=1 // pred_region
      %32 = vsyncadd [#allocation4], 0
      %s34 = sshll.u32 [#allocation5], 4
      %s35 = int_to_ptr.vmem [resolvable:$true] %s34
      %s36 = sshll.u32 %s1, 4
      %s37 = int_to_ptr.hbm [resolvable:$true] %s36
      %39 = dma.vmem_to_hbm [thread:$0]  %s35, 128, %s37, [#allocation4]
    $region13: #{tpu_custom_call.1} parent=1 // pred_fallthru
      _
    // Predicated region
    $region14: #{tpu_custom_call.1} parent=1 // pred_check
      _
    $region15: #{tpu_custom_call.1} parent=1 // pred_check_branch
      %41 = sbr.rel (0) target = $region17
    $region16: #{tpu_custom_call.1} parent=1 // pred_region
      %43 = dma.done [#allocation4], 128
    $region17: #{tpu_custom_call.1} parent=1 // pred_fallthru
      _
    %44 = vsyncpa [#allocation3], 1
    %45 = vsyncpa [#allocation4], 1

</llo_original>
